<compile_context>
chip_gen: v6e
topology: v6e:2x2x1
jax: 0.10.0
libtpu: 0.0.40
codegen_flags: <defaults>
</compile_context>

<pallas_src>
import functools

import jax
import jax.numpy as jnp
from jax.experimental import pallas as pl
from jax.experimental.pallas import tpu as pltpu

KH = KW = 5
STRIDE = 2
PAD = 2

_SELU_ALPHA = 1.6732632423543772
_SELU_SCALE = 1.0507009873554805

# Double-buffered working-set budget used when picking the Cout tile.
# Conservative for v7x (64 MiB physical VMEM); v5e/v6e (128 MiB) could take
# larger tiles, but this op is HBM-bound there anyway.
_VMEM_TILE_BUDGET = 24 * 1024 * 1024


def _cdiv(a, b):
    return -(-a // b)


def _round_up(a, b):
    return _cdiv(a, b) * b


def _double_buffered_bytes(tm, tn, tk):
    # bf16 patch tile + bf16 weight tile + f32 output tile, each 2-deep.
    return 2 * (tm * tk * 2 + tk * tn * 2 + tm * tn * 4)


def _pick_tn(cout_p, tm, tk):
    """Largest multiple-of-128 divisor of cout_p whose tiles fit the budget."""
    for tn in range(cout_p, 0, -128):
        if cout_p % tn == 0 and _double_buffered_bytes(tm, tn, tk) <= _VMEM_TILE_BUDGET:
            return tn
    return 128


def _expm1_neg(y):
    """Accurate expm1 for y <= 0 using only exp/log/where (Kahan's trick)."""
    u = jnp.exp(y)
    safe = (u - 1.0) * y / jnp.log(u)          # dead-branch NaN/inf selected away
    return jnp.where(u == 1.0, y, jnp.where(u == 0.0, -1.0, safe))


def _matmul_bias_selu_kernel(p_ref, w_ref, b_ref, o_ref):
    # p_ref: (tm, tk) bf16 im2col patch tile
    # w_ref: (tk, tn) bf16 reordered conv-weight tile
    # b_ref: (1, tn)  f32 bias tile
    # o_ref: (tm, tn) f32 output tile; resident across the K grid axis so it
    #        doubles as the accumulator (no scratch buffer).
    k = pl.program_id(2)

    @pl.when(k == 0)
    def _():
        o_ref[...] = jnp.zeros_like(o_ref)

    o_ref[...] += jnp.dot(p_ref[...], w_ref[...],
                          preferred_element_type=jnp.float32)

    @pl.when(k == pl.num_programs(2) - 1)
    def _():
        y = o_ref[...] + b_ref[...]
        neg = _SELU_ALPHA * _expm1_neg(jnp.minimum(y, 0.0))
        o_ref[...] = _SELU_SCALE * jnp.where(y > 0.0, y, neg)


def _im2col_nhwc(x_nhwc):
    """x_nhwc: (N, H, W, C) -> patches (N*Ho*Wo, KH*KW*C), K order (kh, kw, c)."""
    n, h, w, c = x_nhwc.shape
    ho = (h + 2 * PAD - KH) // STRIDE + 1
    wo = (w + 2 * PAD - KW) // STRIDE + 1
    xp = jnp.pad(x_nhwc, ((0, 0), (PAD, PAD), (PAD, PAD), (0, 0)))
    cols = []
    for kh in range(KH):
        for kw in range(KW):
            cols.append(xp[:, kh:kh + STRIDE * ho:STRIDE,
                           kw:kw + STRIDE * wo:STRIDE, :])
    # Concatenate along the channel (lane) axis: no big 5-D transpose needed.
    pat = jnp.concatenate(cols, axis=-1)               # (N, Ho, Wo, KH*KW*C)
    return pat.reshape(n * ho * wo, KH * KW * c), ho, wo


@functools.partial(jax.jit, static_argnames=("tm", "tk_max"))
def unet_down_forward(x, weight, bias, *, tm=1024, tk_max=2048):
    """x: (N, Cin, H, W) f32; weight: (Cout, Cin, 5, 5); bias: (Cout,).

    Returns SELU(Conv2d(Cin, Cout, 5, stride=2, padding=2)(x)) as
    (N, Cout, Hout, Wout) in x.dtype (matmul in bf16, f32 accumulation).
    """
    n, _cin, h, w = x.shape
    cout = weight.shape[0]

    # NHWC + bf16 once; patches built lane-major with K order (kh, kw, c).
    x_nhwc = jnp.transpose(x, (0, 2, 3, 1)).astype(jnp.bfloat16)
    patches, ho, wo = _im2col_nhwc(x_nhwc)                       # (M, K) bf16
    m, k = patches.shape

    # Weight K axis permuted to (kh, kw, c) to match the patch layout.
    w_mat = jnp.transpose(weight, (2, 3, 1, 0)).reshape(k, cout)
    w_mat = w_mat.astype(jnp.bfloat16)                           # (K, Cout)
    b_mat = bias.reshape(1, cout).astype(jnp.float32)            # (1, Cout)

    # Lane-dense output: pad Cout to a multiple of 128 (zero weights / bias);
    # pad columns are sliced off in the wrapper.
    cout_p = _round_up(cout, 128)
    if cout_p != cout:
        w_mat = jnp.pad(w_mat, ((0, 0), (0, cout_p - cout)))
        b_mat = jnp.pad(b_mat, ((0, 0), (0, cout_p - cout)))

    # K tiling: full K when small; otherwise a balanced tile (multiple of 256
    # for MXU depth) so pad waste stays small instead of padding to tk_max.
    if k <= tk_max:
        tk = k
    else:
        nk = _cdiv(k, tk_max)
        tk = _round_up(_cdiv(k, nk), 256)
        k_pad = nk * tk
        if k_pad != k:
            patches = jnp.pad(patches, ((0, 0), (0, k_pad - k)))
            w_mat = jnp.pad(w_mat, ((0, k_pad - k), (0, 0)))
        k = k_pad

    # bf16 patch tiles pack 16 rows per vreg -> 16-aligned M tile.
    tm_eff = min(tm, _round_up(m, 16))
    tn_eff = _pick_tn(cout_p, tm_eff, tk)

    # v7x megacore: ensure the parallel part of the grid has >= 2 blocks so
    # the second TensorCore is not idle on small/deep layers.
    if m > 16 and _cdiv(m, tm_eff) == 1 and cout_p // tn_eff == 1:
        tm_eff = _round_up(_cdiv(m, 2), 16)

    grid_m = _cdiv(m, tm_eff)
    grid_n = cout_p // tn_eff
    grid_k = k // tk
    grid = (grid_m, grid_n, grid_k)

    cost = pl.CostEstimate(
        flops=2 * m * k * cout_p,
        transcendentals=m * cout_p,
        # Patch slab is re-read once per Cout tile; weights once per M tile.
        bytes_accessed=(patches.size * 2 * grid_n + w_mat.size * 2 * grid_m
                        + m * cout_p * 4),
    )

    # Explicit VMEM limit: mandatory on v5e (16 MiB scoped default), and kept
    # under v7x's 64 MiB physical VMEM. Default tiles use ~16 MiB.
    vmem_limit = min(
        56 * 1024 * 1024,
        max(32 * 1024 * 1024,
            _double_buffered_bytes(tm_eff, tn_eff, tk) + 8 * 1024 * 1024))

    out_flat = pl.pallas_call(
        _matmul_bias_selu_kernel,
        out_shape=jax.ShapeDtypeStruct((m, cout_p), jnp.float32),
        grid_spec=pltpu.PrefetchScalarGridSpec(
            num_scalar_prefetch=0,
            grid=grid,
            in_specs=[
                pl.BlockSpec((tm_eff, tk), lambda i, j, kk: (i, kk)),
                pl.BlockSpec((tk, tn_eff), lambda i, j, kk: (kk, j)),
                pl.BlockSpec((1, tn_eff), lambda i, j, kk: (0, j)),
            ],
            out_specs=pl.BlockSpec((tm_eff, tn_eff), lambda i, j, kk: (i, j)),
        ),
        compiler_params=pltpu.CompilerParams(
            dimension_semantics=("parallel", "parallel", "arbitrary"),
            vmem_limit_bytes=vmem_limit,
        ),
        cost_estimate=cost,
    )(patches, w_mat, b_mat)

    out = out_flat[:, :cout].reshape(n, ho, wo, cout)            # NHWC
    # TODO(synk): keep NHWC (and bf16) when chaining layers; NCHW kept here to
    # match the PyTorch module's output layout.
    return jnp.transpose(out, (0, 3, 1, 2)).astype(x.dtype)


def _reference(x, weight, bias):
    """Pure-JAX f32 reference: conv2d(5, stride 2, pad 2) + SELU."""
    y = jax.lax.conv_general_dilated(
        x, weight,
        window_strides=(STRIDE, STRIDE),
        padding=((PAD, PAD), (PAD, PAD)),
        dimension_numbers=("NCHW", "OIHW", "NCHW"),
    ) + bias.reshape(1, -1, 1, 1)
    return _SELU_SCALE * jnp.where(y > 0.0, y, _SELU_ALPHA * jnp.expm1(y))


if __name__ == "__main__":
    key = jax.random.PRNGKey(0)
    k_x, k_w, k_b = jax.random.split(key, 3)

    N, CIN, COUT, H, W = 2, 4, 8, 16, 16
    x = jax.random.normal(k_x, (N, CIN, H, W), dtype=jnp.float32)
    weight = jax.random.normal(k_w, (COUT, CIN, KH, KW), dtype=jnp.float32) * 0.1
    bias = jax.random.normal(k_b, (COUT,), dtype=jnp.float32) * 0.1

    out = jax.block_until_ready(unet_down_forward(x, weight, bias))
    ref = jax.block_until_ready(_reference(x, weight, bias))

    assert out.shape == (N, COUT, H // 2, W // 2), out.shape
    max_err = float(jnp.max(jnp.abs(out - ref)))
    # bf16 operands with f32 accumulation: ~1e-2 worst-case abs error.
    assert max_err < 5e-2, max_err

    print("KERNEL_OK")
</pallas_src>

<mosaic_0001>
module attributes {stable_mosaic.version = 11 : i64} {
  func.func @_matmul_bias_selu_kernel(%arg0: i32, %arg1: i32, %arg2: i32, %arg3: memref<64x100xbf16, #tpu.memory_space<vmem>>, %arg4: memref<100x128xbf16, #tpu.memory_space<vmem>>, %arg5: memref<1x128xf32, #tpu.memory_space<vmem>>, %arg6: memref<64x128xf32, #tpu.memory_space<vmem>>) attributes {dimension_semantics = [#tpu.dimension_semantics<parallel>, #tpu.dimension_semantics<parallel>, #tpu.dimension_semantics<arbitrary>], iteration_bounds = array<i64: 2, 1, 1>, scalar_prefetch = 0 : i64, scratch_operands = 0 : i64, tpu.core_type = #tpu.core_type<tc>, window_params = [{transform_indices = @transform_0, window_bounds = array<i64: 64, 100>}, {transform_indices = @transform_1, window_bounds = array<i64: 100, 128>}, {transform_indices = @transform_2, window_bounds = array<i64: 1, 128>}, {transform_indices = @transform_3, window_bounds = array<i64: 64, 128>}]} {
    %c0_i32 = arith.constant 0 : i32
    %0 = arith.cmpi eq, %arg2, %c0_i32 : i32
    %1 = arith.extui %0 : i1 to i32
    %c0_i32_0 = arith.constant 0 : i32
    %2 = arith.cmpi ne, %1, %c0_i32_0 : i32
    scf.if %2 {
      %cst_10 = arith.constant 0.000000e+00 : f32
      %12 = vector.broadcast %cst_10 : f32 to vector<64x128xf32>
      %c0_11 = arith.constant 0 : index
      %c0_12 = arith.constant 0 : index
      %13 = vector.load %arg6[%c0_11, %c0_12] : memref<64x128xf32, #tpu.memory_space<vmem>>, vector<64x128xf32>
      tpu.vector_store %arg6[%c0_11, %c0_12], %12 {strides = array<i32>} : memref<64x128xf32, #tpu.memory_space<vmem>>, vector<64x128xf32>,
    } else {
    }
    %c0 = arith.constant 0 : index
    %c0_1 = arith.constant 0 : index
    %3 = vector.load %arg6[%c0, %c0_1] : memref<64x128xf32, #tpu.memory_space<vmem>>, vector<64x128xf32>
    %c0_2 = arith.constant 0 : index
    %c0_3 = arith.constant 0 : index
    %4 = vector.load %arg3[%c0_2, %c0_3] : memref<64x100xbf16, #tpu.memory_space<vmem>>, vector<64x100xbf16>
    %c0_4 = arith.constant 0 : index
    %c0_5 = arith.constant 0 : index
    %5 = vector.load %arg4[%c0_4, %c0_5] : memref<100x128xbf16, #tpu.memory_space<vmem>>, vector<100x128xbf16>
    %cst = arith.constant dense<0.000000e+00> : vector<64x128xf32>
    %6 = tpu.matmul %4, %5, %cst {dimension_numbers = #tpu.dot_dimension_numbers<[1], [0], [0], [1], [0, 0, 1, 1], [], []>} : vector<64x100xbf16>, vector<100x128xbf16>, vector<64x128xf32> -> vector<64x128xf32>
    %7 = arith.addf %3, %6 : vector<64x128xf32>
    %c0_6 = arith.constant 0 : index
    %c0_7 = arith.constant 0 : index
    %8 = vector.load %arg6[%c0_6, %c0_7] : memref<64x128xf32, #tpu.memory_space<vmem>>, vector<64x128xf32>
    tpu.vector_store %arg6[%c0_6, %c0_7], %7 {strides = array<i32>} : memref<64x128xf32, #tpu.memory_space<vmem>>, vector<64x128xf32>,
    %c0_i32_8 = arith.constant 0 : i32
    %9 = arith.cmpi eq, %arg2, %c0_i32_8 : i32
    %10 = arith.extui %9 : i1 to i32
    %c0_i32_9 = arith.constant 0 : i32
    %11 = arith.cmpi ne, %10, %c0_i32_9 : i32
    scf.if %11 {
      %c0_10 = arith.constant 0 : index
      %c0_11 = arith.constant 0 : index
      %12 = vector.load %arg6[%c0_10, %c0_11] : memref<64x128xf32, #tpu.memory_space<vmem>>, vector<64x128xf32>
      %c0_12 = arith.constant 0 : index
      %c0_13 = arith.constant 0 : index
      %13 = vector.load %arg5[%c0_12, %c0_13] : memref<1x128xf32, #tpu.memory_space<vmem>>, vector<1x128xf32>
      %14 = vector.broadcast %13 : vector<1x128xf32> to vector<64x128xf32>
      %15 = arith.addf %12, %14 : vector<64x128xf32>
      %cst_14 = arith.constant 0.000000e+00 : f32
      %16 = vector.broadcast %cst_14 : f32 to vector<64x128xf32>
      %17 = arith.minimumf %15, %16 : vector<64x128xf32>
      %18 = math.exp %17 : vector<64x128xf32>
      %cst_15 = arith.constant 1.000000e+00 : f32
      %19 = vector.broadcast %cst_15 : f32 to vector<64x128xf32>
      %20 = arith.subf %18, %19 : vector<64x128xf32>
      %21 = arith.mulf %20, %17 : vector<64x128xf32>
      %22 = math.log %18 : vector<64x128xf32>
      %23 = arith.divf %21, %22 : vector<64x128xf32>
      %cst_16 = arith.constant 1.000000e+00 : f32
      %24 = vector.broadcast %cst_16 : f32 to vector<64x128xf32>
      %25 = arith.cmpf oeq, %18, %24 : vector<64x128xf32>
      %cst_17 = arith.constant 0.000000e+00 : f32
      %26 = vector.broadcast %cst_17 : f32 to vector<64x128xf32>
      %27 = arith.cmpf oeq, %18, %26 : vector<64x128xf32>
      %cst_18 = arith.constant -1.000000e+00 : f32
      %28 = vector.broadcast %cst_18 : f32 to vector<64x128xf32>
      %29 = arith.select %27, %28, %23 : vector<64x128xi1>, vector<64x128xf32>
      %30 = arith.select %25, %17, %29 : vector<64x128xi1>, vector<64x128xf32>
      %cst_19 = arith.constant 1.67326319 : f32
      %31 = vector.broadcast %cst_19 : f32 to vector<64x128xf32>
      %32 = arith.mulf %31, %30 : vector<64x128xf32>
      %cst_20 = arith.constant 0.000000e+00 : f32
      %33 = vector.broadcast %cst_20 : f32 to vector<64x128xf32>
      %34 = arith.cmpf ogt, %15, %33 : vector<64x128xf32>
      %35 = arith.select %34, %15, %32 : vector<64x128xi1>, vector<64x128xf32>
      %cst_21 = arith.constant 1.05070102 : f32
      %36 = vector.broadcast %cst_21 : f32 to vector<64x128xf32>
      %37 = arith.mulf %36, %35 : vector<64x128xf32>
      %c0_22 = arith.constant 0 : index
      %c0_23 = arith.constant 0 : index
      %38 = vector.load %arg6[%c0_22, %c0_23] : memref<64x128xf32, #tpu.memory_space<vmem>>, vector<64x128xf32>
      tpu.vector_store %arg6[%c0_22, %c0_23], %37 {strides = array<i32>} : memref<64x128xf32, #tpu.memory_space<vmem>>, vector<64x128xf32>,
    } else {
    }
    return
  }
  func.func @transform_0(%arg0: i32, %arg1: i32, %arg2: i32) -> (i32, i32) {
    %c0_i32 = arith.constant 0 : i32
    return %arg0, %arg2 : i32, i32
  }
  func.func @transform_1(%arg0: i32, %arg1: i32, %arg2: i32) -> (i32, i32) {
    %c0_i32 = arith.constant 0 : i32
    return %arg2, %arg1 : i32, i32
  }
  func.func @transform_2(%arg0: i32, %arg1: i32, %arg2: i32) -> (i32, i32) {
    %c0_i32 = arith.constant 0 : i32
    %c0_i32_0 = arith.constant 0 : i32
    return %c0_i32, %arg1 : i32, i32
  }
  func.func @transform_3(%arg0: i32, %arg1: i32, %arg2: i32) -> (i32, i32) {
    %c0_i32 = arith.constant 0 : i32
    return %arg0, %arg1 : i32, i32
  }
}

</mosaic_0001>

<llo_original>
// kernel: unet_down_forward.1
$region0: #{unet_down_forward.1}
  #allocation0 [shape = 'u32[]', space=smem, size = 0x4, offset = 0x4, fixed_abs, tag = 'smem constant byte address 0x4 - core index']
  #allocation1 [shape = 'u32[144,128]{1,0:T(1,128)}', space=vmem, size = 0x12000, scoped, tag = 'internal scratch']
  %s0 = inlined_call_operand.vmem [shape: bf16[128,100], index: 0, kind: input, shape index: {}]
  %s1 = inlined_call_operand.vmem [shape: bf16[100,128], index: 1, kind: input, shape index: {}]
  %s2 = inlined_call_operand.vmem [shape: f32[1,128], index: 2, kind: input, shape index: {}]
  %s3 = inlined_call_operand.vmem [shape: f32[128,128], index: 3, kind: output, shape index: {}]
  %s4 = sld [smem:[#allocation0]]
  $region53: #{unet_down_forward.1} parent=0
    _
  %s6 = ssub.s32 1, %s4
  %s7 = scalar_select 0, %s6, %s4
  loop: start=0, step=1, limit=4
  $region2: #{unet_down_forward.1} parent=0 // loop_pre_header
    _
  $region3: #{unet_down_forward.1} parent=0 // loop_header
    %s9 = sphi 0, %s13
    %p10 = scmp.ge.s32.totalorder %s9, 4
    %s16 = sphi 0, %s35
    %s17 = sphi 0, %s31
    %s18 = sphi 0, %s27
    %s19 = sphi 0, %s16
    %s20 = sphi 0, %s17
    %s21 = sphi 0, %s18
    %s22 = sphi 0, %s19
    %s23 = sphi 0, %s20
    %s24 = sphi 0, %s21
    %s40 = sphi 0, %s42
    %s43 = sphi 0, %s40
    %s44 = sphi 0, %s43
    %s60 = sphi 0, %s44
    %s68 = sphi 0, %s70
    %s71 = sphi 0, %s68
    %s72 = sphi 0, %s71
    %s88 = sphi 0, %s72
    %s94 = sphi 0, %s96
    %s97 = sphi 0, %s94
    %s98 = sphi 0, %s97
    %s114 = sphi 0, %s98
    %s122 = sphi 0, %s124
    %s125 = sphi 0, %s122
    %s126 = sphi 0, %s125
    %s142 = sphi 0, %s126
  $region4: #{unet_down_forward.1} parent=0 // loop_header_branch
    %12 = sbr.rel (%p10) target = $region8
  $region5: #{unet_down_forward.1} parent=0 // loop_body
    %s14 = ssub.s32 %s9, 1
    %s15 = ssub.s32 %s9, 2
    %s25 = sadd.s32 1, %s18
    %p26 = scmp.ge.s32.totalorder %s25, 1
    %s27 = scalar_select %p26, 0, %s25
    %s28 = sadd.s32 1, %s17
    %s29 = scalar_select %p26, %s28, %s17
    %p30 = scmp.ge.s32.totalorder %s29, 1
    %s31 = scalar_select %p30, 0, %s29
    %s32 = sadd.s32 1, %s16
    %s33 = scalar_select %p30, %s32, %s16
    %p34 = scmp.ge.s32.totalorder %s33, 2
    %s35 = scalar_select %p34, 0, %s33
    %s36 = ssub.s32 %s16, %s35
    %s37 = ssub.s32 %s18, %s27
    %s38 = sor.u32 %s36, %s37
    %p39 = scmp.eq.s32.totalorder %s38, 0
    %s41 = sadd.s32 %s40, 1
    %s42 = scalar_select %p39, %s40, %s41
    %p45 = pneg %p39
    %p46 = scmp.eq.s32.totalorder %s9, 1
    %p47 = por %p45, %p46
    %p48 = scmp.ne.s32.totalorder %s40, %s43
    %p49 = scmp.eq.s32.totalorder %s9, 0
    %p50 = por %p48, %p49
    %p51 = scmp.ne.s32.totalorder %s40, %s43
    %p52 = scmp.eq.s32.totalorder %s14, 1
    %p53 = por %p51, %p52
    %p54 = scmp.ne.s32.totalorder %s43, %s44
    %p55 = scmp.eq.s32.totalorder %s14, 0
    %p56 = por %p54, %p55
    %p57 = scmp.ne.s32.totalorder %s43, %s44
    %p58 = scmp.eq.s32.totalorder %s15, 1
    %p59 = por %p57, %p58
    %p61 = scmp.ne.s32.totalorder %s44, %s60
    %p62 = scmp.eq.s32.totalorder %s15, 0
    %p63 = por %p61, %p62
    %s64 = ssub.s32 %s18, %s27
    %s65 = ssub.s32 %s17, %s31
    %s66 = sor.u32 %s64, %s65
    %p67 = scmp.eq.s32.totalorder %s66, 0
    %s69 = sadd.s32 %s68, 1
    %s70 = scalar_select %p67, %s68, %s69
    %p73 = pneg %p67
    %p74 = scmp.eq.s32.totalorder %s9, 1
    %p75 = por %p73, %p74
    %p76 = scmp.ne.s32.totalorder %s68, %s71
    %p77 = scmp.eq.s32.totalorder %s9, 0
    %p78 = por %p76, %p77
    %p79 = scmp.ne.s32.totalorder %s68, %s71
    %p80 = scmp.eq.s32.totalorder %s14, 1
    %p81 = por %p79, %p80
    %p82 = scmp.ne.s32.totalorder %s71, %s72
    %p83 = scmp.eq.s32.totalorder %s14, 0
    %p84 = por %p82, %p83
    %p85 = scmp.ne.s32.totalorder %s71, %s72
    %p86 = scmp.eq.s32.totalorder %s15, 1
    %p87 = por %p85, %p86
    %p89 = scmp.ne.s32.totalorder %s72, %s88
    %p90 = scmp.eq.s32.totalorder %s15, 0
    %p91 = por %p89, %p90
    %s92 = ssub.s32 %s17, %s31
    %p93 = scmp.eq.s32.totalorder %s92, 0
    %s95 = sadd.s32 %s94, 1
    %s96 = scalar_select %p93, %s94, %s95
    %p99 = pneg %p93
    %p100 = scmp.eq.s32.totalorder %s9, 1
    %p101 = por %p99, %p100
    %p102 = scmp.ne.s32.totalorder %s94, %s97
    %p103 = scmp.eq.s32.totalorder %s9, 0
    %p104 = por %p102, %p103
    %p105 = scmp.ne.s32.totalorder %s94, %s97
    %p106 = scmp.eq.s32.totalorder %s14, 1
    %p107 = por %p105, %p106
    %p108 = scmp.ne.s32.totalorder %s97, %s98
    %p109 = scmp.eq.s32.totalorder %s14, 0
    %p110 = por %p108, %p109
    %p111 = scmp.ne.s32.totalorder %s97, %s98
    %p112 = scmp.eq.s32.totalorder %s15, 1
    %p113 = por %p111, %p112
    %p115 = scmp.ne.s32.totalorder %s98, %s114
    %p116 = scmp.eq.s32.totalorder %s15, 0
    %p117 = por %p115, %p116
    %s118 = ssub.s32 %s16, %s35
    %s119 = ssub.s32 %s17, %s31
    %s120 = sor.u32 %s118, %s119
    %p121 = scmp.eq.s32.totalorder %s120, 0
    %s123 = sadd.s32 %s122, 1
    %s124 = scalar_select %p121, %s122, %s123
    %p127 = pneg %p121
    %p128 = scmp.eq.s32.totalorder %s9, 1
    %p129 = por %p127, %p128
    %p130 = scmp.ne.s32.totalorder %s122, %s125
    %p131 = scmp.eq.s32.totalorder %s9, 0
    %p132 = por %p130, %p131
    %p133 = scmp.ne.s32.totalorder %s122, %s125
    %p134 = scmp.eq.s32.totalorder %s14, 1
    %p135 = por %p133, %p134
    %p136 = scmp.ne.s32.totalorder %s125, %s126
    %p137 = scmp.eq.s32.totalorder %s14, 0
    %p138 = por %p136, %p137
    %p139 = scmp.ne.s32.totalorder %s125, %s126
    %p140 = scmp.eq.s32.totalorder %s15, 1
    %p141 = por %p139, %p140
    %p143 = scmp.ne.s32.totalorder %s126, %s142
    %p144 = scmp.eq.s32.totalorder %s15, 0
    %p145 = por %p143, %p144
    %p146 = scmp.le.s32.totalorder 1, %s9
    %p147 = scmp.lt.s32.totalorder %s9, 3
    %p148 = pnand %p146, %p147
    %p149 = pneg %p148
    // Predicated region
    $region9: #{unet_down_forward.1} parent=5 // pred_check
      _
    $region10: #{unet_down_forward.1} parent=5 // pred_check_branch
      %151 = sbr.rel (%p148) target = $region12
    $region11: #{unet_down_forward.1} parent=5 // pred_region
      %s152 = ssub.s32 %s9, 1
      // Predicated region
      $region13: #{unet_down_forward.1} parent=11 // pred_check
        %p153 = pneg %p84
      $region14: #{unet_down_forward.1} parent=11 // pred_check_branch
        %155 = sbr.rel (%p153) target = $region16
      $region15: #{unet_down_forward.1} parent=11 // pred_region
        %s156 = smul.u32 13, %s21
        %p157 = scmp.lt.s32.totalorder %s156, 12
        %s158 = scalar_select %p157, %s156, 12
        %p159 = scmp.lt.s32.totalorder %s20, 0
        %s160 = scalar_select %p159, %s20, 0
        %s161 = sadd.s32 %s160, %s158
        %s162 = smul.addr %s161, 4
        %s163 = scalar_lea.vmem %s1, %s162
        %s164 = smul.u32 13, %s21
      $region16: #{unet_down_forward.1} parent=11 // pred_fallthru
        _
      // Predicated region
      $region17: #{unet_down_forward.1} parent=11 // pred_check
        %p165 = pneg %p110
      $region18: #{unet_down_forward.1} parent=11 // pred_check_branch
        %167 = sbr.rel (%p165) target = $region20
      $region19: #{unet_down_forward.1} parent=11 // pred_region
        %p168 = scmp.lt.s32.totalorder %s20, 0
        %s169 = scalar_select %p168, %s20, 0
        %s170 = scalar_lea.vmem %s2, %s169
      $region20: #{unet_down_forward.1} parent=11 // pred_fallthru
        _
    $region12: #{unet_down_forward.1} parent=5 // pred_fallthru
      _
    %p171 = scmp.lt.s32.totalorder %s9, 2
    // Predicated region
    $region21: #{unet_down_forward.1} parent=5 // pred_check
      %p172 = pneg %p171
    $region22: #{unet_down_forward.1} parent=5 // pred_check_branch
      %174 = sbr.rel (%p172) target = $region24
    $region23: #{unet_down_forward.1} parent=5 // pred_region
      // Predicated region
      $region25: #{unet_down_forward.1} parent=23 // pred_check
        %p175 = pneg %p50
      $region26: #{unet_down_forward.1} parent=23 // pred_check_branch
        %177 = sbr.rel (%p175) target = $region28
      $region27: #{unet_down_forward.1} parent=23 // pred_region
        %s178 = smul.u32 8, %s16
        %p179 = scmp.lt.s32.totalorder %s178, 15
        %s180 = scalar_select %p179, %s178, 15
        %p181 = scmp.lt.s32.totalorder %s18, 0
        %s182 = scalar_select %p181, %s18, 0
        %s183 = sadd.s32 %s182, %s180
        %s184 = smul.addr %s183, 4
        %s185 = scalar_lea.vmem %s0, %s184
        %s186 = smul.u32 8, %s16
      $region28: #{unet_down_forward.1} parent=23 // pred_fallthru
        _
    $region24: #{unet_down_forward.1} parent=5 // pred_fallthru
      _
    %p187 = scmp.le.s32.totalorder 1, %s9
    %p188 = scmp.lt.s32.totalorder %s9, 3
    %p189 = pnand %p187, %p188
    %p190 = pneg %p189
    // Predicated region
    $region29: #{unet_down_forward.1} parent=5 // pred_check
      _
    $region30: #{unet_down_forward.1} parent=5 // pred_check_branch
      %192 = sbr.rel (%p189) target = $region32
    $region31: #{unet_down_forward.1} parent=5 // pred_region
      %s193 = ssub.s32 %s9, 1
      %s194 = smul.u32 8, %s19
      %p195 = scmp.lt.s32.totalorder %s194, 15
      %s196 = scalar_select %p195, %s194, 15
      %p197 = scmp.lt.s32.totalorder %s21, 0
      %s198 = scalar_select %p197, %s21, 0
      %s199 = sadd.s32 %s198, %s196
      %s200 = smul.addr %s199, 4
      %s201 = scalar_lea.vmem %s0, %s200
      %p202 = pneg %p56
      %p203 = pneg %p53
      %s204 = smul.u32 13, %s21
      %p205 = scmp.lt.s32.totalorder %s204, 12
      %s206 = scalar_select %p205, %s204, 12
      %p207 = scmp.lt.s32.totalorder %s20, 0
      %s208 = scalar_select %p207, %s20, 0
      %s209 = sadd.s32 %s208, %s206
      %s210 = smul.addr %s209, 4
      %s211 = scalar_lea.vmem %s1, %s210
      %p212 = pneg %p84
      %p213 = pneg %p81
      %p214 = scmp.lt.s32.totalorder %s20, 0
      %s215 = scalar_select %p214, %s20, 0
      %s216 = scalar_lea.vmem %s2, %s215
      %p217 = pneg %p110
      %p218 = pneg %p107
      %p219 = pneg %p138
      %p220 = pneg %p135
      %s221 = smul.u32 8, %s19
      %p222 = scmp.lt.s32.totalorder %s221, 15
      %s223 = scalar_select %p222, %s221, 15
      %p224 = scmp.lt.s32.totalorder %s20, 0
      %s225 = scalar_select %p224, %s20, 0
      %s226 = sadd.s32 %s225, %s223
      %s227 = smul.addr %s226, 8
      %s228 = scalar_lea.vmem %s3, %s227
      %s229 = smul.u32 8, %s19
      %p230 = scmp.lt.s32.totalorder %s229, 15
      %s231 = scalar_select %p230, %s229, 15
      %p232 = scmp.lt.s32.totalorder %s21, 0
      %s233 = scalar_select %p232, %s21, 0
      %s234 = sadd.s32 %s233, %s231
      %s235 = smul.addr %s234, 4
      %s236 = scalar_lea.vmem %s0, %s235
      %s237 = smul.u32 8, %s19
      %s238 = smul.u32 13, %s21
      %p239 = scmp.lt.s32.totalorder %s238, 12
      %s240 = scalar_select %p239, %s238, 12
      %p241 = scmp.lt.s32.totalorder %s20, 0
      %s242 = scalar_select %p241, %s20, 0
      %s243 = sadd.s32 %s242, %s240
      %s244 = smul.addr %s243, 4
      %s245 = scalar_lea.vmem %s1, %s244
      %s246 = smul.u32 13, %s21
      %p247 = scmp.lt.s32.totalorder %s20, 0
      %s248 = scalar_select %p247, %s20, 0
      %s249 = scalar_lea.vmem %s2, %s248
      %s250 = smul.u32 8, %s19
      %p251 = scmp.lt.s32.totalorder %s250, 15
      %s252 = scalar_select %p251, %s250, 15
      %p253 = scmp.lt.s32.totalorder %s20, 0
      %s254 = scalar_select %p253, %s20, 0
      %s255 = sadd.s32 %s254, %s252
      %s256 = smul.addr %s255, 8
      %s257 = scalar_lea.vmem %s3, %s256
      %s258 = smul.u32 8, %s19
      %p260 = scmp.eq.s32.totalorder %s21, 0
      // Predicated region
      $region33: #{unet_down_forward.1} parent=31 // pred_check
        %p261 = pneg %p260
      $region34: #{unet_down_forward.1} parent=31 // pred_check_branch
        %263 = sbr.rel (%p261) target = $region36
      $region35: #{unet_down_forward.1} parent=31 // pred_region
        %264 = vst [vmem:[%s257] sm:$0xff] 0.0
        %265 = vst [vmem:[%s257 + $0x8] sm:$0xff] 0.0
        %266 = vst [vmem:[%s257 + $0x10] sm:$0xff] 0.0
        %267 = vst [vmem:[%s257 + $0x18] sm:$0xff] 0.0
        %268 = vst [vmem:[%s257 + $0x20] sm:$0xff] 0.0
        %269 = vst [vmem:[%s257 + $0x28] sm:$0xff] 0.0
        %270 = vst [vmem:[%s257 + $0x30] sm:$0xff] 0.0
        %271 = vst [vmem:[%s257 + $0x38] sm:$0xff] 0.0
      $region36: #{unet_down_forward.1} parent=31 // pred_fallthru
        _
      %v272 = vld [vmem:[%s257] sm:$0xff]
      %v273 = vld [vmem:[%s257 + $0x8] sm:$0xff]
      %v274 = vld [vmem:[%s257 + $0x10] sm:$0xff]
      %v275 = vld [vmem:[%s257 + $0x18] sm:$0xff]
      %v276 = vld [vmem:[%s257 + $0x20] sm:$0xff]
      %v277 = vld [vmem:[%s257 + $0x28] sm:$0xff]
      %v278 = vld [vmem:[%s257 + $0x30] sm:$0xff]
      %v279 = vld [vmem:[%s257 + $0x38] sm:$0xff]
      %v280 = vld [vmem:[%s236] sm:$0xf]
      %v281 = vld [vmem:[%s236 + $0x4] sm:$0xf]
      %v282 = vld [vmem:[%s236 + $0x8] sm:$0xf]
      %v283 = vld [vmem:[%s236 + $0xc] sm:$0xf]
      %v284 = vld [vmem:[%s236 + $0x10] sm:$0xf]
      %v285 = vld [vmem:[%s236 + $0x14] sm:$0xf]
      %v286 = vld [vmem:[%s236 + $0x18] sm:$0xf]
      %v287 = vld [vmem:[%s236 + $0x1c] sm:$0xf]
      %v288 = vld [vmem:[%s245] sm:$0xf]
      %v289 = vld [vmem:[%s245 + $0x4] sm:$0xf]
      %v290 = vld [vmem:[%s245 + $0x8] sm:$0xf]
      %v291 = vld [vmem:[%s245 + $0xc] sm:$0xf]
      %v292 = vld [vmem:[%s245 + $0x10] sm:$0xf]
      %v293 = vld [vmem:[%s245 + $0x14] sm:$0xf]
      %v294 = vld [vmem:[%s245 + $0x18] sm:$0xf]
      %v295 = vld [vmem:[%s245 + $0x1c] sm:$0xf]
      %v296 = vld [vmem:[%s245 + $0x20] sm:$0xf]
      %v297 = vld [vmem:[%s245 + $0x24] sm:$0xf]
      %v298 = vld [vmem:[%s245 + $0x28] sm:$0xf]
      %v299 = vld [vmem:[%s245 + $0x2c] sm:$0xf]
      %v300 = vld [vmem:[%s245 + $0x30] sm:$0x3]
      %v309 = vunpack.c.l.b16 %v280
      %v310 = vunpack.c.l.b16 %v281
      %v311 = vunpack.c.l.b16 %v282
      %v312 = vunpack.c.l.b16 %v283
      %v313 = vunpack.c.l.b16 %v284
      %v314 = vunpack.c.l.b16 %v285
      %v315 = vunpack.c.l.b16 %v286
      %v316 = vunpack.c.l.b16 %v287
      %v317 = vpack.c.b16 %v310, %v309
      %v318 = vpack.c.b16 %v312, %v311
      %v319 = vpack.c.b16 %v314, %v313
      %v320 = vpack.c.b16 %v316, %v315
      %v334 = vunpack.c.l.b16 %v288
      %v335 = vunpack.c.l.b16 %v289
      %v336 = vunpack.c.l.b16 %v290
      %v337 = vunpack.c.l.b16 %v291
      %v338 = vunpack.c.l.b16 %v292
      %v339 = vunpack.c.l.b16 %v293
      %v340 = vunpack.c.l.b16 %v294
      %v341 = vunpack.c.l.b16 %v295
      %v342 = vunpack.c.l.b16 %v296
      %v343 = vunpack.c.l.b16 %v297
      %v344 = vunpack.c.l.b16 %v298
      %v345 = vunpack.c.l.b16 %v299
      %v346 = vunpack.c.l.b16 %v300
      %v347 = vpack.c.b16 %v335, %v334
      %v348 = vpack.c.b16 %v337, %v336
      %v349 = vpack.c.b16 %v339, %v338
      %v350 = vpack.c.b16 %v341, %v340
      %v351 = vpack.c.b16 %v343, %v342
      %v352 = vpack.c.b16 %v345, %v344
      %v353 = vpack.c.b16 %v346, %v346
      %vm360 = vcmask 818176
      %v362 = vsel %vm360, %v317, 0
      %v365 = vsel %vm360, %v318, 0
      %v368 = vsel %vm360, %v319, 0
      %v371 = vsel %vm360, %v320, 0
      %vm373 = vcmask 1041408
      %v375 = vsel %vm373, %v353, 0
      %377 = vmatprep.subr.bf16.mxu0 0
      %378 = vmatpush1.bf16.msra.mxu0 0
      %379 = vmatprep.subr.bf16.mxu0 0
      %380 = vmatpush1.bf16.msra.mxu0 %v375
      %381 = vmatprep.subr.bf16.mxu0 0
      %382 = vmatpush1.bf16.msra.mxu0 %v352
      %383 = vmatprep.subr.bf16.mxu0 0
      %384 = vmatpush1.bf16.msra.mxu0 %v351
      %385 = vmatprep.subr.bf16.mxu0 0
      %386 = vmatpush1.bf16.msra.mxu0 %v350
      %387 = vmatprep.subr.bf16.mxu0 0
      %388 = vmatpush1.bf16.msra.mxu0 %v349
      %389 = vmatprep.subr.bf16.mxu0 0
      %390 = vmatpush1.bf16.msra.mxu0 %v348
      %391 = vmatprep.subr.bf16.mxu0 0
      %392 = vmatpush1.bf16.msra.mxu0 %v347
      %393 = vmatprep.subr.bf16.mxu0 0
      %394 = vmatpush2.bf16.msra.mxu0 0
      %395 = vmatprep.subr.bf16.mxu0 0
      %396 = vmatpush2.bf16.msra.mxu0 0
      %397 = vmatprep.subr.bf16.mxu0 0
      %398 = vmatpush2.bf16.msra.mxu0 0
      %399 = vmatprep.subr.bf16.mxu0 0
      %400 = vmatpush2.bf16.msra.mxu0 0
      %401 = vmatprep.subr.bf16.mxu0 0
      %402 = vmatpush2.bf16.msra.mxu0 0
      %403 = vmatprep.subr.bf16.mxu0 0
      %404 = vmatpush2.bf16.msra.mxu0 0
      %405 = vmatprep.subr.bf16.mxu0 0
      %406 = vmatpush2.bf16.msra.mxu0 0
      %407 = vmatprep.subr.bf16.mxu0 0
      %408 = vmatpush2.bf16.msra.mxu0 0
      %409 = vmatprep.mubr.bf16.mxu0 0
      %410 = vmatmul.mubr.bf16.gmra.mxu0 %v362
      %v411 = vpop.f32.mrf.mxu0
      %v412 = vadd.f32 0.0, %v411
      %v413 = vpop.f32.mrf.mxu0
      %v414 = vpop.f32.mrf.mxu0
      %v415 = vadd.f32 0.0, %v414
      %v416 = vpop.f32.mrf.mxu0
      %417 = vmatprep.mubr.bf16.mxu0 0
      %418 = vmatmul.mubr.bf16.gmra.mxu0 %v365
      %v419 = vpop.f32.mrf.mxu0
      %v420 = vadd.f32 0.0, %v419
      %v421 = vpop.f32.mrf.mxu0
      %v422 = vpop.f32.mrf.mxu0
      %v423 = vadd.f32 0.0, %v422
      %v424 = vpop.f32.mrf.mxu0
      %425 = vmatprep.mubr.bf16.mxu0 0
      %426 = vmatmul.mubr.bf16.gmra.mxu0 %v368
      %v427 = vpop.f32.mrf.mxu0
      %v428 = vadd.f32 0.0, %v427
      %v429 = vpop.f32.mrf.mxu0
      %v430 = vpop.f32.mrf.mxu0
      %v431 = vadd.f32 0.0, %v430
      %v432 = vpop.f32.mrf.mxu0
      %433 = vmatprep.mubr.bf16.mxu0 0
      %434 = vmatmul.mubr.bf16.gmra.mxu0 %v371
      %v435 = vpop.f32.mrf.mxu0
      %v436 = vadd.f32 0.0, %v435
      %v437 = vpop.f32.mrf.mxu0
      %v438 = vpop.f32.mrf.mxu0
      %v439 = vadd.f32 0.0, %v438
      %v440 = vpop.f32.mrf.mxu0
      %441 = vdwg.mxu0
      %v442 = vadd.f32 %v272, %v412
      %v443 = vadd.f32 %v273, %v415
      %v444 = vadd.f32 %v274, %v420
      %v445 = vadd.f32 %v275, %v423
      %v446 = vadd.f32 %v276, %v428
      %v447 = vadd.f32 %v277, %v431
      %v448 = vadd.f32 %v278, %v436
      %v449 = vadd.f32 %v279, %v439
      %450 = vst [vmem:[%s257] sm:$0xff] %v442
      %451 = vst [vmem:[%s257 + $0x8] sm:$0xff] %v443
      %452 = vst [vmem:[%s257 + $0x10] sm:$0xff] %v444
      %453 = vst [vmem:[%s257 + $0x18] sm:$0xff] %v445
      %454 = vst [vmem:[%s257 + $0x20] sm:$0xff] %v446
      %455 = vst [vmem:[%s257 + $0x28] sm:$0xff] %v447
      %456 = vst [vmem:[%s257 + $0x30] sm:$0xff] %v448
      %457 = vst [vmem:[%s257 + $0x38] sm:$0xff] %v449
      // Predicated region
      $region37: #{unet_down_forward.1} parent=31 // pred_check
        %p458 = pneg %p260
      $region38: #{unet_down_forward.1} parent=31 // pred_check_branch
        %460 = sbr.rel (%p458) target = $region40
      $region39: #{unet_down_forward.1} parent=31 // pred_region
        %v461 = vld [vmem:[%s257] sm:$0xff]
        %v462 = vld [vmem:[%s257 + $0x8] sm:$0xff]
        %v463 = vld [vmem:[%s257 + $0x10] sm:$0xff]
        %v464 = vld [vmem:[%s257 + $0x18] sm:$0xff]
        %v465 = vld [vmem:[%s257 + $0x20] sm:$0xff]
        %v466 = vld [vmem:[%s257 + $0x28] sm:$0xff]
        %v467 = vld [vmem:[%s257 + $0x30] sm:$0xff]
        %v468 = vld [vmem:[%s257 + $0x38] sm:$0xff]
        %v469 = vld [vmem:[%s249] sm:$0x1]
        %v471 = vlaneseq
        %v472 = vshrl.u32 %v471, 7
        %v473 = vsub.s32 0, %v472
        %v474 = vrot.slane %v469, %v473
        %v476 = vadd.f32 %v461, %v474
        %v477 = vadd.f32 %v462, %v474
        %v478 = vadd.f32 %v463, %v474
        %v479 = vadd.f32 %v464, %v474
        %v480 = vadd.f32 %v465, %v474
        %v481 = vadd.f32 %v466, %v474
        %v482 = vadd.f32 %v467, %v474
        %v483 = vadd.f32 %v468, %v474
        %v484 = vmin.f32 %v476, 0.0
        %v485 = vmin.f32 %v477, 0.0
        %v486 = vmin.f32 %v478, 0.0
        %v487 = vmin.f32 %v479, 0.0
        %v488 = vmin.f32 %v480, 0.0
        %v489 = vmin.f32 %v481, 0.0
        %v490 = vmin.f32 %v482, 0.0
        %v491 = vmin.f32 %v483, 0.0
        %v492 = vmul.f32 %v484, 1.442695
        %v493 = vpow.pop %v492
        %v494 = vmul.f32 %v485, 1.442695
        %v495 = vpow.pop %v494
        %v496 = vmul.f32 %v486, 1.442695
        %v497 = vpow.pop %v496
        %v498 = vmul.f32 %v487, 1.442695
        %v499 = vpow.pop %v498
        %v500 = vmul.f32 %v488, 1.442695
        %v501 = vpow.pop %v500
        %v502 = vmul.f32 %v489, 1.442695
        %v503 = vpow.pop %v502
        %v504 = vmul.f32 %v490, 1.442695
        %v505 = vpow.pop %v504
        %v506 = vmul.f32 %v491, 1.442695
        %v507 = vpow.pop %v506
        %v508 = vsub.f32 %v493, 1.0
        %v509 = vsub.f32 %v495, 1.0
        %v510 = vsub.f32 %v497, 1.0
        %v511 = vsub.f32 %v499, 1.0
        %v512 = vsub.f32 %v501, 1.0
        %v513 = vsub.f32 %v503, 1.0
        %v514 = vsub.f32 %v505, 1.0
        %v515 = vsub.f32 %v507, 1.0
        %v516 = vmul.f32 %v508, %v484
        %v517 = vmul.f32 %v509, %v485
        %v518 = vmul.f32 %v510, %v486
        %v519 = vmul.f32 %v511, %v487
        %v520 = vmul.f32 %v512, %v488
        %v521 = vmul.f32 %v513, %v489
        %v522 = vmul.f32 %v514, %v490
        %v523 = vmul.f32 %v515, %v491
        %v524 = vlog2.pop %v493
        %v525 = vmul.f32 %v524, 0.6931472
        %v526 = vlog2.pop %v495
        %v527 = vmul.f32 %v526, 0.6931472
        %v528 = vlog2.pop %v497
        %v529 = vmul.f32 %v528, 0.6931472
        %v530 = vlog2.pop %v499
        %v531 = vmul.f32 %v530, 0.6931472
        %v532 = vlog2.pop %v501
        %v533 = vmul.f32 %v532, 0.6931472
        %v534 = vlog2.pop %v503
        %v535 = vmul.f32 %v534, 0.6931472
        %v536 = vlog2.pop %v505
        %v537 = vmul.f32 %v536, 0.6931472
        %v538 = vlog2.pop %v507
        %v539 = vmul.f32 %v538, 0.6931472
        %v540 = vrcp.pop %v525
        %v541 = vmul.f32 %v516, %v540
        %v542 = vrcp.pop %v527
        %v543 = vmul.f32 %v517, %v542
        %v544 = vrcp.pop %v529
        %v545 = vmul.f32 %v518, %v544
        %v546 = vrcp.pop %v531
        %v547 = vmul.f32 %v519, %v546
        %v548 = vrcp.pop %v533
        %v549 = vmul.f32 %v520, %v548
        %v550 = vrcp.pop %v535
        %v551 = vmul.f32 %v521, %v550
        %v552 = vrcp.pop %v537
        %v553 = vmul.f32 %v522, %v552
        %v554 = vrcp.pop %v539
        %v555 = vmul.f32 %v523, %v554
        %vm556 = vcmp.eq.f32.partialorder %v493, 1.0
        %vm557 = vcmp.eq.f32.partialorder %v495, 1.0
        %vm558 = vcmp.eq.f32.partialorder %v497, 1.0
        %vm559 = vcmp.eq.f32.partialorder %v499, 1.0
        %vm560 = vcmp.eq.f32.partialorder %v501, 1.0
        %vm561 = vcmp.eq.f32.partialorder %v503, 1.0
        %vm562 = vcmp.eq.f32.partialorder %v505, 1.0
        %vm563 = vcmp.eq.f32.partialorder %v507, 1.0
        %vm564 = vcmp.eq.f32.partialorder %v493, 0.0
        %vm565 = vcmp.eq.f32.partialorder %v495, 0.0
        %vm566 = vcmp.eq.f32.partialorder %v497, 0.0
        %vm567 = vcmp.eq.f32.partialorder %v499, 0.0
        %vm568 = vcmp.eq.f32.partialorder %v501, 0.0
        %vm569 = vcmp.eq.f32.partialorder %v503, 0.0
        %vm570 = vcmp.eq.f32.partialorder %v505, 0.0
        %vm571 = vcmp.eq.f32.partialorder %v507, 0.0
        %v572 = vsel %vm564, -1.0, %v541
        %v573 = vsel %vm565, -1.0, %v543
        %v574 = vsel %vm566, -1.0, %v545
        %v575 = vsel %vm567, -1.0, %v547
        %v576 = vsel %vm568, -1.0, %v549
        %v577 = vsel %vm569, -1.0, %v551
        %v578 = vsel %vm570, -1.0, %v553
        %v579 = vsel %vm571, -1.0, %v555
        %v580 = vsel %vm556, %v484, %v572
        %v581 = vsel %vm557, %v485, %v573
        %v582 = vsel %vm558, %v486, %v574
        %v583 = vsel %vm559, %v487, %v575
        %v584 = vsel %vm560, %v488, %v576
        %v585 = vsel %vm561, %v489, %v577
        %v586 = vsel %vm562, %v490, %v578
        %v587 = vsel %vm563, %v491, %v579
        %v588 = vmul.f32 %v580, 1.6732632
        %v589 = vmul.f32 %v581, 1.6732632
        %v590 = vmul.f32 %v582, 1.6732632
        %v591 = vmul.f32 %v583, 1.6732632
        %v592 = vmul.f32 %v584, 1.6732632
        %v593 = vmul.f32 %v585, 1.6732632
        %v594 = vmul.f32 %v586, 1.6732632
        %v595 = vmul.f32 %v587, 1.6732632
        %vm596 = vcmp.gt.f32.partialorder %v476, 0.0
        %vm597 = vcmp.gt.f32.partialorder %v477, 0.0
        %vm598 = vcmp.gt.f32.partialorder %v478, 0.0
        %vm599 = vcmp.gt.f32.partialorder %v479, 0.0
        %vm600 = vcmp.gt.f32.partialorder %v480, 0.0
        %vm601 = vcmp.gt.f32.partialorder %v481, 0.0
        %vm602 = vcmp.gt.f32.partialorder %v482, 0.0
        %vm603 = vcmp.gt.f32.partialorder %v483, 0.0
        %v604 = vsel %vm596, %v476, %v588
        %v605 = vsel %vm597, %v477, %v589
        %v606 = vsel %vm598, %v478, %v590
        %v607 = vsel %vm599, %v479, %v591
        %v608 = vsel %vm600, %v480, %v592
        %v609 = vsel %vm601, %v481, %v593
        %v610 = vsel %vm602, %v482, %v594
        %v611 = vsel %vm603, %v483, %v595
        %v612 = vmul.f32 %v604, 1.050701
        %v613 = vmul.f32 %v605, 1.050701
        %v614 = vmul.f32 %v606, 1.050701
        %v615 = vmul.f32 %v607, 1.050701
        %v616 = vmul.f32 %v608, 1.050701
        %v617 = vmul.f32 %v609, 1.050701
        %v618 = vmul.f32 %v610, 1.050701
        %v619 = vmul.f32 %v611, 1.050701
        %620 = vst [vmem:[%s257] sm:$0xff] %v612
        %621 = vst [vmem:[%s257 + $0x8] sm:$0xff] %v613
        %622 = vst [vmem:[%s257 + $0x10] sm:$0xff] %v614
        %623 = vst [vmem:[%s257 + $0x18] sm:$0xff] %v615
        %624 = vst [vmem:[%s257 + $0x20] sm:$0xff] %v616
        %625 = vst [vmem:[%s257 + $0x28] sm:$0xff] %v617
        %626 = vst [vmem:[%s257 + $0x30] sm:$0xff] %v618
        %627 = vst [vmem:[%s257 + $0x38] sm:$0xff] %v619
      $region40: #{unet_down_forward.1} parent=31 // pred_fallthru
        _
      %s628 = smul.u32 8, %s19
      %p629 = scmp.lt.s32.totalorder %s628, 15
      %s630 = scalar_select %p629, %s628, 15
      %p631 = scmp.lt.s32.totalorder %s20, 0
      %s632 = scalar_select %p631, %s20, 0
      %s633 = sadd.s32 %s632, %s630
      %s634 = smul.addr %s633, 8
      %s635 = scalar_lea.vmem %s3, %s634
      // Predicated region
      $region41: #{unet_down_forward.1} parent=31 // pred_check
        %p636 = pneg %p135
      $region42: #{unet_down_forward.1} parent=31 // pred_check_branch
        %638 = sbr.rel (%p636) target = $region44
      $region43: #{unet_down_forward.1} parent=31 // pred_region
        %s639 = smul.u32 8, %s19
      $region44: #{unet_down_forward.1} parent=31 // pred_fallthru
        _
    $region32: #{unet_down_forward.1} parent=5 // pred_fallthru
      _
    %p640 = scmp.le.s32.totalorder 2, %s9
    // Predicated region
    $region45: #{unet_down_forward.1} parent=5 // pred_check
      %p641 = pneg %p640
    $region46: #{unet_down_forward.1} parent=5 // pred_check_branch
      %643 = sbr.rel (%p641) target = $region48
    $region47: #{unet_down_forward.1} parent=5 // pred_region
      %s644 = ssub.s32 %s9, 2
      // Predicated region
      $region49: #{unet_down_forward.1} parent=47 // pred_check
        %p645 = pneg %p141
      $region50: #{unet_down_forward.1} parent=47 // pred_check_branch
        %647 = sbr.rel (%p645) target = $region52
      $region51: #{unet_down_forward.1} parent=47 // pred_region
        %s648 = smul.u32 8, %s22
        %p649 = scmp.lt.s32.totalorder %s648, 15
        %s650 = scalar_select %p649, %s648, 15
        %p651 = scmp.lt.s32.totalorder %s23, 0
        %s652 = scalar_select %p651, %s23, 0
        %s653 = sadd.s32 %s652, %s650
        %s654 = smul.addr %s653, 8
        %s655 = scalar_lea.vmem %s3, %s654
      $region52: #{unet_down_forward.1} parent=47 // pred_fallthru
        _
    $region48: #{unet_down_forward.1} parent=5 // pred_fallthru
      _
  $region6: #{unet_down_forward.1} parent=0 // loop_footer
    %s13 = sadd.s32 1, %s9
  $region7: #{unet_down_forward.1} parent=0 // loop_footer_branch
    %8 = sbr.rel target = $region3
  $region8: #{unet_down_forward.1} parent=0 // loop_exit
    _

</llo_original>
